<compile_context>
chip_gen: v5e
topology: v5e:2x2
jax: 0.10.0
libtpu: 0.0.40
codegen_flags: <defaults>
</compile_context>

<pallas_src>
import jax
import jax.numpy as jnp
from jax.experimental import pallas as pl
from jax.experimental.pallas import tpu as pltpu

LANE = 128
SUBLANE = 8
# Leading "parallel" grid axis size. On 2-TC chips (v4/v5p/v7x) megacore shards
# this axis across cores; on v5e/v6e it is a harmless serial split.
NSPLIT = 2


def _make_msle_kernel(weighted, tm):
    """Build the kernel body. `weighted` / `tm` are static Python values."""

    def kernel(x_ref, t_ref, *rest):
        if weighted:
            w_ref, out_ref = rest
        else:
            (out_ref,) = rest

        @pl.when(pl.program_id(1) == 0)
        def _init():
            out_ref[...] = jnp.zeros_like(out_ref)

        # Padded entries are 0 in every stream -> d == 0 -> contribute exactly 0,
        # so no element mask is needed anywhere.
        d = jnp.log1p(x_ref[...]) - jnp.log1p(t_ref[...])
        contrib = d * d
        if weighted:
            contrib = contrib * w_ref[...]

        # VPU-only partial reduction (tm, 128) -> (8, 128) accumulated into the
        # resident output block; the cross-lane reduce is deferred to the wrapper.
        out_ref[...] += jnp.sum(
            contrib.reshape(tm // SUBLANE, SUBLANE, LANE), axis=0
        )

    return kernel


def msle_loss(inp, target, lds_weight=None, *, block_rows=1024):
    """Mean squared log error. inp/target/(lds_weight): shape (N, 1), values >= 0."""
    # TODO(synk): the PyTorch module's data-dependent asserts (input.min() >= 0,
    # target.min() >= 0) are not representable inside a traced kernel; values < -1
    # produce NaN exactly like the reference.
    assert inp.shape == target.shape
    assert block_rows % SUBLANE == 0
    n = int(inp.size)
    weighted = lds_weight is not None

    # Lane-dense slab geometry with exact grid coverage (no edge / clamped blocks).
    rows_needed = pl.cdiv(n, LANE)                       # rows of 128 lanes actually used
    nsplit = NSPLIT if rows_needed > SUBLANE else 1      # tiny inputs: skip the split
    per_split = pl.cdiv(pl.cdiv(rows_needed, nsplit), SUBLANE) * SUBLANE
    tm = min(block_rows, per_split)                      # multiple of 8 either way
    bps = pl.cdiv(per_split, tm)                         # blocks per split
    rows = nsplit * bps * tm                             # every (c, i) maps to a distinct block

    def to_slab(v):
        flat = jnp.asarray(v, jnp.float32).reshape(-1)
        pad = rows * LANE - n
        if pad:  # zero padding contributes exactly 0 to the loss sum
            flat = jnp.pad(flat, (0, pad))
        return flat.reshape(rows, LANE)

    args = [to_slab(inp), to_slab(target)]
    if weighted:
        args.append(to_slab(lds_weight))

    in_spec = pl.BlockSpec((tm, LANE), lambda c, i: (c * bps + i, 0))
    out_spec = pl.BlockSpec((SUBLANE, LANE), lambda c, i: (c, 0))

    partials = pl.pallas_call(
        _make_msle_kernel(weighted, tm),
        out_shape=jax.ShapeDtypeStruct((nsplit * SUBLANE, LANE), jnp.float32),
        grid_spec=pltpu.PrefetchScalarGridSpec(
            num_scalar_prefetch=0,
            grid=(nsplit, bps),
            in_specs=[in_spec] * len(args),
            out_specs=out_spec,
        ),
        compiler_params=pltpu.CompilerParams(
            dimension_semantics=("parallel", "arbitrary")
        ),
    )(*args)

    # Final cross-lane/cross-split reduce + mean in plain JAX (at most 2*8*128 f32).
    return (jnp.sum(partials) / n).astype(jnp.float32)


def _msle_ref(inp, target, lds_weight=None):
    loss = (jnp.log(jnp.asarray(inp, jnp.float32) + 1.0)
            - jnp.log(jnp.asarray(target, jnp.float32) + 1.0)) ** 2
    if lds_weight is not None:
        loss = loss * jnp.asarray(lds_weight, jnp.float32)
    return jnp.mean(loss)


if __name__ == "__main__":
    key = jax.random.PRNGKey(0)
    k1, k2, k3, k4, k5, k6 = jax.random.split(key, 6)

    # Small primary case (N = 64), with and without LDS weights.
    n = 64
    inp = jax.random.uniform(k1, (n, 1), jnp.float32, minval=0.0, maxval=3.0)
    tgt = jax.random.uniform(k2, (n, 1), jnp.float32, minval=0.0, maxval=3.0)
    lds = jax.random.uniform(k3, (n, 1), jnp.float32, minval=0.0, maxval=1.0)

    out_w = jax.block_until_ready(msle_loss(inp, tgt, lds))
    ref_w = _msle_ref(inp, tgt, lds)
    assert jnp.allclose(out_w, ref_w, rtol=1e-5, atol=1e-6), (out_w, ref_w)

    out = jax.block_until_ready(msle_loss(inp, tgt))
    ref = _msle_ref(inp, tgt)
    assert jnp.allclose(out, ref, rtol=1e-5, atol=1e-6), (out, ref)

    # Docstring example values.
    tgt_d = jnp.array([1.0, 1.2, 0.0, 2.0]).reshape(-1, 1)
    inp_d = jnp.array([0.6, 0.7, 0.3, 0.8]).reshape(-1, 1)
    lds_d = jnp.array([0.1, 0.2, 0.3, 0.4]).reshape(-1, 1)
    out_d = jax.block_until_ready(msle_loss(inp_d, tgt_d, lds_d))
    ref_d = _msle_ref(inp_d, tgt_d, lds_d)
    assert jnp.allclose(out_d, ref_d, rtol=1e-5, atol=1e-6), (out_d, ref_d)

    # Multi-split / multi-block path (small block_rows forces grid=(2, 2) with a
    # zero-padded tail block on the second split).
    n2 = 3000
    inp2 = jax.random.uniform(k4, (n2, 1), jnp.float32, minval=0.0, maxval=3.0)
    tgt2 = jax.random.uniform(k5, (n2, 1), jnp.float32, minval=0.0, maxval=3.0)
    lds2 = jax.random.uniform(k6, (n2, 1), jnp.float32, minval=0.0, maxval=1.0)

    out2_w = jax.block_until_ready(msle_loss(inp2, tgt2, lds2, block_rows=8))
    ref2_w = _msle_ref(inp2, tgt2, lds2)
    assert jnp.allclose(out2_w, ref2_w, rtol=1e-5, atol=1e-6), (out2_w, ref2_w)

    out2 = jax.block_until_ready(msle_loss(inp2, tgt2, block_rows=8))
    ref2 = _msle_ref(inp2, tgt2)
    assert jnp.allclose(out2, ref2, rtol=1e-5, atol=1e-6), (out2, ref2)

    # Exactly-divisible path (no padding, no wrapper-side copy), grid=(2, 1).
    n3 = 2048
    inp3 = jax.random.uniform(k4, (n3, 1), jnp.float32, minval=0.0, maxval=3.0)
    tgt3 = jax.random.uniform(k5, (n3, 1), jnp.float32, minval=0.0, maxval=3.0)
    out3 = jax.block_until_ready(msle_loss(inp3, tgt3, block_rows=8))
    ref3 = _msle_ref(inp3, tgt3)
    assert jnp.allclose(out3, ref3, rtol=1e-5, atol=1e-6), (out3, ref3)

    print("KERNEL_OK")
</pallas_src>

<mosaic_0001>
module attributes {stable_mosaic.version = 11 : i64} {
  func.func @kernel(%arg0: i32, %arg1: i32, %arg2: memref<8x128xf32, #tpu.memory_space<vmem>>, %arg3: memref<8x128xf32, #tpu.memory_space<vmem>>, %arg4: memref<8x128xf32, #tpu.memory_space<vmem>>, %arg5: memref<8x128xf32, #tpu.memory_space<vmem>>) attributes {dimension_semantics = [#tpu.dimension_semantics<parallel>, #tpu.dimension_semantics<arbitrary>], iteration_bounds = array<i64: 1, 1>, scalar_prefetch = 0 : i64, scratch_operands = 0 : i64, tpu.core_type = #tpu.core_type<tc>, window_params = [{transform_indices = @transform_0, window_bounds = array<i64: 8, 128>}, {transform_indices = @transform_1, window_bounds = array<i64: 8, 128>}, {transform_indices = @transform_2, window_bounds = array<i64: 8, 128>}, {transform_indices = @transform_3, window_bounds = array<i64: 8, 128>}]} {
    %c0_i32 = arith.constant 0 : i32
    %0 = arith.cmpi eq, %arg1, %c0_i32 : i32
    %1 = arith.extui %0 : i1 to i32
    %c0_i32_0 = arith.constant 0 : i32
    %2 = arith.cmpi ne, %1, %c0_i32_0 : i32
    scf.if %2 {
      %cst_10 = arith.constant 0.000000e+00 : f32
      %16 = vector.broadcast %cst_10 : f32 to vector<8x128xf32>
      %c0_11 = arith.constant 0 : index
      %c0_12 = arith.constant 0 : index
      %17 = vector.load %arg5[%c0_11, %c0_12] : memref<8x128xf32, #tpu.memory_space<vmem>>, vector<8x128xf32>
      tpu.vector_store %arg5[%c0_11, %c0_12], %16 {strides = array<i32>} : memref<8x128xf32, #tpu.memory_space<vmem>>, vector<8x128xf32>,
    } else {
    }
    %c0 = arith.constant 0 : index
    %c0_1 = arith.constant 0 : index
    %3 = vector.load %arg2[%c0, %c0_1] : memref<8x128xf32, #tpu.memory_space<vmem>>, vector<8x128xf32>
    %4 = math.log1p %3 : vector<8x128xf32>
    %c0_2 = arith.constant 0 : index
    %c0_3 = arith.constant 0 : index
    %5 = vector.load %arg3[%c0_2, %c0_3] : memref<8x128xf32, #tpu.memory_space<vmem>>, vector<8x128xf32>
    %6 = math.log1p %5 : vector<8x128xf32>
    %7 = arith.subf %4, %6 : vector<8x128xf32>
    %8 = arith.mulf %7, %7 : vector<8x128xf32>
    %c0_4 = arith.constant 0 : index
    %c0_5 = arith.constant 0 : index
    %9 = vector.load %arg4[%c0_4, %c0_5] : memref<8x128xf32, #tpu.memory_space<vmem>>, vector<8x128xf32>
    %10 = arith.mulf %8, %9 : vector<8x128xf32>
    %c0_6 = arith.constant 0 : index
    %c0_7 = arith.constant 0 : index
    %11 = vector.load %arg5[%c0_6, %c0_7] : memref<8x128xf32, #tpu.memory_space<vmem>>, vector<8x128xf32>
    %12 = vector.shape_cast %10 : vector<8x128xf32> to vector<1x8x128xf32>
    %cst = arith.constant dense<0.000000e+00> : vector<8x128xf32>
    %13 = vector.multi_reduction <add>, %12, %cst [0] : vector<1x8x128xf32> to vector<8x128xf32>
    %14 = arith.addf %11, %13 : vector<8x128xf32>
    %c0_8 = arith.constant 0 : index
    %c0_9 = arith.constant 0 : index
    %15 = vector.load %arg5[%c0_8, %c0_9] : memref<8x128xf32, #tpu.memory_space<vmem>>, vector<8x128xf32>
    tpu.vector_store %arg5[%c0_8, %c0_9], %14 {strides = array<i32>} : memref<8x128xf32, #tpu.memory_space<vmem>>, vector<8x128xf32>,
    return
  }
  func.func @transform_0(%arg0: i32, %arg1: i32) -> (i32, i32) {
    %c1_i32 = arith.constant 1 : i32
    %0 = arith.muli %arg0, %c1_i32 : i32
    %1 = arith.addi %0, %arg1 : i32
    %c0_i32 = arith.constant 0 : i32
    %c0_i32_0 = arith.constant 0 : i32
    return %1, %c0_i32 : i32, i32
  }
  func.func @transform_1(%arg0: i32, %arg1: i32) -> (i32, i32) {
    %c1_i32 = arith.constant 1 : i32
    %0 = arith.muli %arg0, %c1_i32 : i32
    %1 = arith.addi %0, %arg1 : i32
    %c0_i32 = arith.constant 0 : i32
    %c0_i32_0 = arith.constant 0 : i32
    return %1, %c0_i32 : i32, i32
  }
  func.func @transform_2(%arg0: i32, %arg1: i32) -> (i32, i32) {
    %c1_i32 = arith.constant 1 : i32
    %0 = arith.muli %arg0, %c1_i32 : i32
    %1 = arith.addi %0, %arg1 : i32
    %c0_i32 = arith.constant 0 : i32
    %c0_i32_0 = arith.constant 0 : i32
    return %1, %c0_i32 : i32, i32
  }
  func.func @transform_3(%arg0: i32, %arg1: i32) -> (i32, i32) {
    %c0_i32 = arith.constant 0 : i32
    %c0_i32_0 = arith.constant 0 : i32
    return %arg0, %c0_i32 : i32, i32
  }
}

</mosaic_0001>

<llo_original>
// kernel: tpu_custom_call.1
$region0: #{tpu_custom_call.1}
  #allocation0 [shape = 'u32[]', space=smem, size = 0x4, offset = 0x4, fixed_abs, tag = 'smem constant byte address 0x4 - core index']
  #allocation1 [shape = 'u32[72,128]{1,0:T(1,128)}', space=vmem, size = 0x9000, scoped, tag = 'internal scratch']
  %s0 = inlined_call_operand.hbm [shape: f32[8,128], index: 0, kind: input, shape index: {}]
  %s1 = inlined_call_operand.hbm [shape: f32[8,128], index: 1, kind: input, shape index: {}]
  %s2 = inlined_call_operand.hbm [shape: f32[8,128], index: 2, kind: input, shape index: {}]
  %s3 = inlined_call_operand.hbm [shape: f32[8,128], index: 3, kind: output, shape index: {}]
  %s4 = sld [smem:[#allocation0]]
  $region38: #{tpu_custom_call.1} parent=0
    _
  %s6 = ssub.s32 1, %s4
  %s7 = scalar_select 0, %s6, %s4
  $region1: #{tpu_custom_call.1} parent=0
    #allocation2 [shape = 'u8[4096]{0}', space=vmem, size = 0x1000, scoped, tag = 'input window, operand 0, single buffered']
    #allocation3 [shape = 's32[1]{0}', space=sflag, size = 0x4, scoped, tag = 'scoped memory for tpu_custom_call.1']
    #allocation4 [shape = 's32[1]{0}', space=sflag, size = 0x4, scoped, tag = 'scoped memory for tpu_custom_call.1']
    #allocation5 [shape = 'u8[4096]{0}', space=vmem, size = 0x1000, scoped, tag = 'input window, operand 1, single buffered']
    #allocation6 [shape = 's32[1]{0}', space=sflag, size = 0x4, scoped, tag = 'scoped memory for tpu_custom_call.1']
    #allocation7 [shape = 'u8[4096]{0}', space=vmem, size = 0x1000, scoped, tag = 'input window, operand 2, single buffered']
    #allocation8 [shape = 'u8[4096]{0}', space=vmem, size = 0x1000, scoped, tag = 'output window, operand 0, single buffered']
    %8 = vsyncpa [#allocation3], 0
    %9 = vsyncpa [#allocation6], 0
    %10 = vsyncpa [#allocation4], 0
    // Predicated region
    $region2: #{tpu_custom_call.1} parent=1 // pred_check
      _
    $region3: #{tpu_custom_call.1} parent=1 // pred_check_branch
      %12 = sbr.rel (0) target = $region5
    $region4: #{tpu_custom_call.1} parent=1 // pred_region
      %s13 = sadd.s32 0, 0
      %15 = vsyncadd [#allocation3], 0
      %s16 = smul.addr %s13, 8
      %s17 = scalar_lea.hbm %s0, %s16
      %s19 = sshll.u32 %s17, 4
      %s20 = int_to_ptr.hbm [resolvable:$true] %s19
      %s21 = sshll.u32 [#allocation2], 4
      %s22 = int_to_ptr.vmem [resolvable:$true] %s21
      %24 = dma.hbm_to_vmem [thread:$0]  %s20, 128, %s22, [#allocation3]
    $region5: #{tpu_custom_call.1} parent=1 // pred_fallthru
      _
    // Predicated region
    $region6: #{tpu_custom_call.1} parent=1 // pred_check
      _
    $region7: #{tpu_custom_call.1} parent=1 // pred_check_branch
      %26 = sbr.rel (0) target = $region9
    $region8: #{tpu_custom_call.1} parent=1 // pred_region
      %s27 = sadd.s32 0, 0
      %29 = vsyncadd [#allocation6], 0
      %s30 = smul.addr %s27, 8
      %s31 = scalar_lea.hbm %s1, %s30
      %s33 = sshll.u32 %s31, 4
      %s34 = int_to_ptr.hbm [resolvable:$true] %s33
      %s35 = sshll.u32 [#allocation5], 4
      %s36 = int_to_ptr.vmem [resolvable:$true] %s35
      %38 = dma.hbm_to_vmem [thread:$0]  %s34, 128, %s36, [#allocation6]
    $region9: #{tpu_custom_call.1} parent=1 // pred_fallthru
      _
    // Predicated region
    $region10: #{tpu_custom_call.1} parent=1 // pred_check
      _
    $region11: #{tpu_custom_call.1} parent=1 // pred_check_branch
      %40 = sbr.rel (0) target = $region13
    $region12: #{tpu_custom_call.1} parent=1 // pred_region
      %s41 = sadd.s32 0, 0
      %43 = vsyncadd [#allocation6], 0
      %s44 = smul.addr %s41, 8
      %s45 = scalar_lea.hbm %s2, %s44
      %s47 = sshll.u32 %s45, 4
      %s48 = int_to_ptr.hbm [resolvable:$true] %s47
      %s49 = sshll.u32 [#allocation7], 4
      %s50 = int_to_ptr.vmem [resolvable:$true] %s49
      %52 = dma.hbm_to_vmem [thread:$0]  %s48, 128, %s50, [#allocation6]
    $region13: #{tpu_custom_call.1} parent=1 // pred_fallthru
      _
    // Predicated region
    $region14: #{tpu_custom_call.1} parent=1 // pred_check
      _
    $region15: #{tpu_custom_call.1} parent=1 // pred_check_branch
      %54 = sbr.rel (0) target = $region17
    $region16: #{tpu_custom_call.1} parent=1 // pred_region
      %56 = dma.done [#allocation3], 128
    $region17: #{tpu_custom_call.1} parent=1 // pred_fallthru
      _
    // Predicated region
    $region18: #{tpu_custom_call.1} parent=1 // pred_check
      _
    $region19: #{tpu_custom_call.1} parent=1 // pred_check_branch
      %58 = sbr.rel (0) target = $region21
    $region20: #{tpu_custom_call.1} parent=1 // pred_region
      %60 = dma.done [#allocation6], 128
    $region21: #{tpu_custom_call.1} parent=1 // pred_fallthru
      _
    // Predicated region
    $region22: #{tpu_custom_call.1} parent=1 // pred_check
      _
    $region23: #{tpu_custom_call.1} parent=1 // pred_check_branch
      %62 = sbr.rel (0) target = $region25
    $region24: #{tpu_custom_call.1} parent=1 // pred_region
      %64 = dma.done [#allocation6], 128
    $region25: #{tpu_custom_call.1} parent=1 // pred_fallthru
      _
    %s65 = sadd.s32 0, 0
    %s66 = sadd.s32 0, 0
    %s67 = sadd.s32 0, 0
    %p68 = scmp.eq.s32.totalorder 0, 0
    // Predicated region
    $region26: #{tpu_custom_call.1} parent=1 // pred_check
      %p69 = pneg %p68
    $region27: #{tpu_custom_call.1} parent=1 // pred_check_branch
      %71 = sbr.rel (%p69) target = $region29
    $region28: #{tpu_custom_call.1} parent=1 // pred_region
      %72 = vst [vmem:[#allocation8] sm:$0xff] 0.0
    $region29: #{tpu_custom_call.1} parent=1 // pred_fallthru
      _
    %v73 = vld [vmem:[#allocation2] sm:$0xff]
    %v74 = vadd.f32 %v73, 1.0
    %v75 = vlog2.pop %v74
    %v76 = vmul.f32 %v75, 0.6931472
    %v77 = vmul.f32 -0.5, %v73
    %v78 = vadd.f32 %v77, 1.0
    %v79 = vmul.f32 %v78, %v73
    %v80 = vand.u32 2147483647, %v73
    %vm81 = vcmp.lt.f32.partialorder %v80, 0.0004427343
    %v82 = vsel %vm81, %v79, %v76
    %v83 = vld [vmem:[#allocation5] sm:$0xff]
    %v84 = vadd.f32 %v83, 1.0
    %v85 = vlog2.pop %v84
    %v86 = vmul.f32 %v85, 0.6931472
    %v87 = vmul.f32 -0.5, %v83
    %v88 = vadd.f32 %v87, 1.0
    %v89 = vmul.f32 %v88, %v83
    %v90 = vand.u32 2147483647, %v83
    %vm91 = vcmp.lt.f32.partialorder %v90, 0.0004427343
    %v92 = vsel %vm91, %v89, %v86
    %v93 = vsub.f32 %v82, %v92
    %v94 = vmul.f32 %v93, %v93
    %v95 = vld [vmem:[#allocation7] sm:$0xff]
    %v96 = vmul.f32 %v94, %v95
    %v97 = vld [vmem:[#allocation8] sm:$0xff]
    %v98 = vadd.f32 %v96, 0.0
    %v99 = vadd.f32 %v97, %v98
    %100 = vst [vmem:[#allocation8] sm:$0xff] %v99
    // Predicated region
    $region30: #{tpu_custom_call.1} parent=1 // pred_check
      _
    $region31: #{tpu_custom_call.1} parent=1 // pred_check_branch
      %102 = sbr.rel (0) target = $region33
    $region32: #{tpu_custom_call.1} parent=1 // pred_region
      %104 = vsyncadd [#allocation4], 0
      %s106 = sshll.u32 [#allocation8], 4
      %s107 = int_to_ptr.vmem [resolvable:$true] %s106
      %s108 = sshll.u32 %s3, 4
      %s109 = int_to_ptr.hbm [resolvable:$true] %s108
      %111 = dma.vmem_to_hbm [thread:$0]  %s107, 128, %s109, [#allocation4]
    $region33: #{tpu_custom_call.1} parent=1 // pred_fallthru
      _
    // Predicated region
    $region34: #{tpu_custom_call.1} parent=1 // pred_check
      _
    $region35: #{tpu_custom_call.1} parent=1 // pred_check_branch
      %113 = sbr.rel (0) target = $region37
    $region36: #{tpu_custom_call.1} parent=1 // pred_region
      %115 = dma.done [#allocation4], 128
    $region37: #{tpu_custom_call.1} parent=1 // pred_fallthru
      _
    %116 = vsyncpa [#allocation3], 1
    %117 = vsyncpa [#allocation6], 1
    %118 = vsyncpa [#allocation4], 1

</llo_original>
